<compile_context>
chip_gen: v5e
topology: v5e:2x2
jax: 0.10.0
libtpu: 0.0.40
codegen_flags: <defaults>
</compile_context>

<pallas_src>
import jax
import jax.numpy as jnp
import numpy as np
from jax.experimental import pallas as pl
from jax.experimental.pallas import tpu as pltpu

# ---- module config (d_model / nhead / dim_feedforward, small test shapes) ----
D_MODEL = 32
NHEAD = 4
DIM_FF = 64
HEAD_DIM = D_MODEL // NHEAD
SEQ = 8
BATCH = 2
BS = BATCH * SEQ          # total rows (seq-major: row r = s*BATCH + b)
EPS = 1e-5                # nn.LayerNorm default

# Softmax denominator: EUP approximate reciprocal (set False for <1e-4 accuracy).
APPROX_SOFTMAX_RECIP = True


def encoder_layer_kernel(x_ref, pos_ref, w_attn_ref, w1_ref, w2_ref, vec_ref, o_ref):
    E, FF, HD = D_MODEL, DIM_FF, HEAD_DIM

    x = x_ref[...]                       # (BS, E), seq-major rows (s*B + b)
    qk_in = x + pos_ref[...]             # q = k = with_pos_embed(src, pos)

    w_attn = w_attn_ref[...]             # (E, 4E) = [Wq^T*scale | Wk^T | Wv^T | Wo^T]
    vec = vec_ref[...]                   # (9, 128) packed biases / LN params

    w_qkv = w_attn[:, 0:3 * E]           # (E, 3E) fused Q/K/V projection weight
    w_o = w_attn[:, 3 * E:4 * E]         # (E, E)

    b_qk = vec[0, 0:2 * E]               # q-bias (pre-scaled) | k-bias
    b_v = vec[1, 0:E]
    b_o = vec[2, 0:E]
    b1 = vec[3, 0:FF]
    b2 = vec[4, 0:E]
    g1 = vec[5, 0:E]
    be1 = vec[6, 0:E]
    g2 = vec[7, 0:E]
    be2 = vec[8, 0:E]

    # --- fused Q/K/V projection: one MXU push on the row-stacked input ---
    x_cat = jnp.concatenate([qk_in, x], axis=0)                       # (2*BS, E)
    proj = jnp.dot(x_cat, w_qkv, preferred_element_type=jnp.float32)  # (2*BS, 3E)
    qk = proj[0:BS, 0:2 * E] + b_qk          # (BS, 2E): Q (scale folded) | K
    v = proj[BS:2 * BS, 2 * E:3 * E] + b_v   # (BS, E)

    # --- cross-batch mask bias: rows/cols are (s, b) pairs, batch = idx % B ---
    rb = jax.lax.broadcasted_iota(jnp.int32, (BS, BS), 0) % BATCH
    cb = jax.lax.broadcasted_iota(jnp.int32, (BS, BS), 1) % BATCH
    mask_bias = jnp.where(rb == cb, 0.0, -1e30).astype(jnp.float32)   # (BS, BS)

    # --- attention: static head loop, 2-D dots, masked softmax ---
    ctx_heads = []
    for h in range(NHEAD):
        lo = h * HD
        qh = qk[:, lo:lo + HD]               # (BS, hd)
        kh = qk[:, E + lo:E + lo + HD]       # (BS, hd)
        vh = v[:, lo:lo + HD]                # (BS, hd)
        s = jax.lax.dot_general(qh, kh, (((1,), (1,)), ((), ())),
                                preferred_element_type=jnp.float32)   # (BS, BS)
        s = s + mask_bias
        s = s - jnp.max(s, axis=-1, keepdims=True)
        p = jnp.exp(s)
        p = p * pl.reciprocal(jnp.sum(p, axis=-1, keepdims=True),
                              approx=APPROX_SOFTMAX_RECIP)
        ctx_heads.append(jnp.dot(p, vh, preferred_element_type=jnp.float32))

    # single out-projection dot on the lane-concatenated heads
    ctx = jnp.concatenate(ctx_heads, axis=1)                          # (BS, E)
    attn_out = jnp.dot(ctx, w_o, preferred_element_type=jnp.float32) + b_o

    # --- residual + LayerNorm1 (dropout1 = identity, single-pass stats) ---
    y = x + attn_out
    mu = jnp.mean(y, axis=-1, keepdims=True)
    var = jnp.mean(y * y, axis=-1, keepdims=True) - mu * mu
    y = (y - mu) * jax.lax.rsqrt(var + EPS) * g1 + be1

    # --- feed-forward: linear1 -> relu -> linear2 (weights pre-transposed) ---
    h1 = jnp.maximum(jnp.dot(y, w1_ref[...], preferred_element_type=jnp.float32) + b1, 0.0)
    h2 = jnp.dot(h1, w2_ref[...], preferred_element_type=jnp.float32) + b2

    # --- residual + LayerNorm2 (dropout2 = identity, single-pass stats) ---
    z = y + h2
    mu2 = jnp.mean(z, axis=-1, keepdims=True)
    var2 = jnp.mean(z * z, axis=-1, keepdims=True) - mu2 * mu2
    o_ref[...] = (z - mu2) * jax.lax.rsqrt(var2 + EPS) * g2 + be2


def pack_params(params):
    """One-time (outside jit) packing: transpose weights, fold the attention
    scale into the Q projection, pack every bias / LN vector into (9, 128)."""
    E, FF = D_MODEL, DIM_FF
    scale = 1.0 / (HEAD_DIM ** 0.5)
    in_w = np.asarray(params["in_w"], np.float32)        # (3E, E)
    in_b = np.asarray(params["in_b"], np.float32)[0]     # (3E,)
    w_attn = np.concatenate(
        [in_w[0:E].T * scale,                            # Wq^T (scale folded)
         in_w[E:2 * E].T,                                # Wk^T
         in_w[2 * E:3 * E].T,                            # Wv^T
         np.asarray(params["out_w"], np.float32).T],     # Wo^T
        axis=1)                                          # (E, 4E) = (32, 128)
    w1_t = np.asarray(params["w1"], np.float32).T        # (E, FF)
    w2_t = np.asarray(params["w2"], np.float32).T        # (FF, E)

    def row(vals):
        r = np.zeros((128,), np.float32)
        r[:vals.shape[0]] = vals
        return r

    vec = np.stack([
        row(np.concatenate([in_b[0:E] * scale, in_b[E:2 * E]])),  # q(scaled)|k bias
        row(in_b[2 * E:3 * E]),                                   # v bias
        row(np.asarray(params["out_b"], np.float32)[0]),          # out bias
        row(np.asarray(params["b1"], np.float32)[0]),
        row(np.asarray(params["b2"], np.float32)[0]),
        row(np.asarray(params["g1"], np.float32)[0]),
        row(np.asarray(params["be1"], np.float32)[0]),
        row(np.asarray(params["g2"], np.float32)[0]),
        row(np.asarray(params["be2"], np.float32)[0]),
    ])                                                            # (9, 128)
    return (jnp.asarray(w_attn), jnp.asarray(w1_t),
            jnp.asarray(w2_t), jnp.asarray(vec))


@jax.jit
def transformer_encoder_layer(src, pos, w_attn, w1_t, w2_t, vec):
    """src, pos: (S, B, E). Weights pre-packed via pack_params. Returns (S, B, E)."""
    S, B, E = src.shape
    # Contiguous leading-dim merges: free bitcasts, no transpose, no HBM traffic.
    x2d = src.reshape(S * B, E)
    p2d = pos.reshape(S * B, E)

    vmem = pl.BlockSpec(memory_space=pltpu.MemorySpace.VMEM)
    out2d = pl.pallas_call(
        encoder_layer_kernel,
        out_shape=jax.ShapeDtypeStruct((S * B, E), jnp.float32),
        in_specs=[vmem] * 6,
        out_specs=vmem,
        # advisory: ~0.4 MFLOP, ~1.2k transcendentals, ~48 KiB touched
        cost_estimate=pl.CostEstimate(flops=400_000, transcendentals=1_200,
                                      bytes_accessed=48_000),
        # gridless single invocation: every operand DMA'd to VMEM exactly once.
    )(x2d, p2d, w_attn, w1_t, w2_t, vec)

    return out2d.reshape(S, B, E)


def reference_layer(src, pos, params):
    """Pure-JAX reference replicating PyTorch forward_post (eval mode)."""
    q_in = src + pos
    E = D_MODEL
    in_w, in_b = params["in_w"], params["in_b"][0]
    q = jnp.einsum("sbe,fe->sbf", q_in, in_w[0:E]) + in_b[0:E]
    k = jnp.einsum("sbe,fe->sbf", q_in, in_w[E:2 * E]) + in_b[E:2 * E]
    v = jnp.einsum("sbe,fe->sbf", src, in_w[2 * E:3 * E]) + in_b[2 * E:3 * E]
    S, B, _ = src.shape

    def split(t):  # (S,B,E) -> (B, H, S, hd)
        return jnp.transpose(t.reshape(S, B, NHEAD, HEAD_DIM), (1, 2, 0, 3))

    qh, kh, vh = split(q) / (HEAD_DIM ** 0.5), split(k), split(v)
    scores = jnp.einsum("bhqd,bhkd->bhqk", qh, kh)
    attn = jax.nn.softmax(scores, axis=-1)
    o = jnp.einsum("bhqk,bhkd->bhqd", attn, vh)            # (B,H,S,hd)
    o = jnp.transpose(o, (2, 0, 1, 3)).reshape(S, B, E)
    o = jnp.einsum("sbe,fe->sbf", o, params["out_w"]) + params["out_b"][0]

    def ln(x, g, b):
        mu = jnp.mean(x, axis=-1, keepdims=True)
        var = jnp.mean((x - mu) ** 2, axis=-1, keepdims=True)
        return (x - mu) * jax.lax.rsqrt(var + EPS) * g[0] + b[0]

    y = ln(src + o, params["g1"], params["be1"])
    h1 = jnp.maximum(jnp.einsum("sbe,fe->sbf", y, params["w1"]) + params["b1"][0], 0.0)
    h2 = jnp.einsum("sbf,ef->sbe", h1, params["w2"]) + params["b2"][0]
    return ln(y + h2, params["g2"], params["be2"])


def make_params(key):
    ks = jax.random.split(key, 8)
    s = 0.05
    return {
        "in_w": jax.random.normal(ks[0], (3 * D_MODEL, D_MODEL), jnp.float32) * s,
        "in_b": jax.random.normal(ks[1], (1, 3 * D_MODEL), jnp.float32) * s,
        "out_w": jax.random.normal(ks[2], (D_MODEL, D_MODEL), jnp.float32) * s,
        "out_b": jax.random.normal(ks[3], (1, D_MODEL), jnp.float32) * s,
        "w1": jax.random.normal(ks[4], (DIM_FF, D_MODEL), jnp.float32) * s,
        "b1": jax.random.normal(ks[5], (1, DIM_FF), jnp.float32) * s,
        "w2": jax.random.normal(ks[6], (D_MODEL, DIM_FF), jnp.float32) * s,
        "b2": jax.random.normal(ks[7], (1, D_MODEL), jnp.float32) * s,
        "g1": jnp.ones((1, D_MODEL), jnp.float32),
        "be1": jnp.zeros((1, D_MODEL), jnp.float32),
        "g2": jnp.ones((1, D_MODEL), jnp.float32),
        "be2": jnp.zeros((1, D_MODEL), jnp.float32),
    }


if __name__ == "__main__":
    key = jax.random.PRNGKey(0)
    k_src, k_pos, k_par = jax.random.split(key, 3)
    src = jax.random.normal(k_src, (SEQ, BATCH, D_MODEL), jnp.float32)
    pos = jax.random.normal(k_pos, (SEQ, BATCH, D_MODEL), jnp.float32)
    params = make_params(k_par)

    packed = pack_params(params)   # packed ONCE, outside the jitted call path

    out = jax.block_until_ready(transformer_encoder_layer(src, pos, *packed))
    ref = jax.block_until_ready(reference_layer(src, pos, params))

    assert out.shape == (SEQ, BATCH, D_MODEL)
    # Tolerance 1e-3 only to accommodate the EUP approximate reciprocal used for
    # the softmax denominator; APPROX_SOFTMAX_RECIP=False recovers <1e-4 agreement.
    np.testing.assert_allclose(np.asarray(out), np.asarray(ref), atol=1e-3, rtol=1e-3)

    print("KERNEL_OK")
</pallas_src>

<mosaic_0001>
module attributes {stable_mosaic.version = 11 : i64} {
  func.func @encoder_layer_kernel(%arg0: memref<16x32xf32, #tpu.memory_space<vmem>>, %arg1: memref<16x32xf32, #tpu.memory_space<vmem>>, %arg2: memref<32x128xf32, #tpu.memory_space<vmem>>, %arg3: memref<32x64xf32, #tpu.memory_space<vmem>>, %arg4: memref<64x32xf32, #tpu.memory_space<vmem>>, %arg5: memref<9x128xf32, #tpu.memory_space<vmem>>, %arg6: memref<16x32xf32, #tpu.memory_space<vmem>>) attributes {dimension_semantics = [], scalar_prefetch = 0 : i64, scratch_operands = 0 : i64, tpu.core_type = #tpu.core_type<tc>} {
    %c0 = arith.constant 0 : index
    %c0_0 = arith.constant 0 : index
    %0 = vector.load %arg0[%c0, %c0_0] : memref<16x32xf32, #tpu.memory_space<vmem>>, vector<16x32xf32>
    %c0_1 = arith.constant 0 : index
    %c0_2 = arith.constant 0 : index
    %1 = vector.load %arg1[%c0_1, %c0_2] : memref<16x32xf32, #tpu.memory_space<vmem>>, vector<16x32xf32>
    %2 = arith.addf %0, %1 : vector<16x32xf32>
    %c0_3 = arith.constant 0 : index
    %c0_4 = arith.constant 0 : index
    %3 = vector.load %arg2[%c0_3, %c0_4] : memref<32x128xf32, #tpu.memory_space<vmem>>, vector<32x128xf32>
    %c0_5 = arith.constant 0 : index
    %c0_6 = arith.constant 0 : index
    %4 = vector.load %arg5[%c0_5, %c0_6] : memref<9x128xf32, #tpu.memory_space<vmem>>, vector<9x128xf32>
    %5 = vector.extract_strided_slice %3 {offsets = [0, 0], sizes = [32, 96], strides = [1, 1]} : vector<32x128xf32> to vector<32x96xf32>
    %6 = vector.extract_strided_slice %3 {offsets = [0, 96], sizes = [32, 32], strides = [1, 1]} : vector<32x128xf32> to vector<32x32xf32>
    %7 = vector.extract_strided_slice %4 {offsets = [0, 0], sizes = [1, 64], strides = [1, 1]} : vector<9x128xf32> to vector<1x64xf32>
    %8 = vector.shape_cast %7 : vector<1x64xf32> to vector<64xf32>
    %9 = vector.extract_strided_slice %4 {offsets = [1, 0], sizes = [1, 32], strides = [1, 1]} : vector<9x128xf32> to vector<1x32xf32>
    %10 = vector.shape_cast %9 : vector<1x32xf32> to vector<32xf32>
    %11 = vector.extract_strided_slice %4 {offsets = [2, 0], sizes = [1, 32], strides = [1, 1]} : vector<9x128xf32> to vector<1x32xf32>
    %12 = vector.shape_cast %11 : vector<1x32xf32> to vector<32xf32>
    %13 = vector.extract_strided_slice %4 {offsets = [3, 0], sizes = [1, 64], strides = [1, 1]} : vector<9x128xf32> to vector<1x64xf32>
    %14 = vector.shape_cast %13 : vector<1x64xf32> to vector<64xf32>
    %15 = vector.extract_strided_slice %4 {offsets = [4, 0], sizes = [1, 32], strides = [1, 1]} : vector<9x128xf32> to vector<1x32xf32>
    %16 = vector.shape_cast %15 : vector<1x32xf32> to vector<32xf32>
    %17 = vector.extract_strided_slice %4 {offsets = [5, 0], sizes = [1, 32], strides = [1, 1]} : vector<9x128xf32> to vector<1x32xf32>
    %18 = vector.shape_cast %17 : vector<1x32xf32> to vector<32xf32>
    %19 = vector.extract_strided_slice %4 {offsets = [6, 0], sizes = [1, 32], strides = [1, 1]} : vector<9x128xf32> to vector<1x32xf32>
    %20 = vector.shape_cast %19 : vector<1x32xf32> to vector<32xf32>
    %21 = vector.extract_strided_slice %4 {offsets = [7, 0], sizes = [1, 32], strides = [1, 1]} : vector<9x128xf32> to vector<1x32xf32>
    %22 = vector.shape_cast %21 : vector<1x32xf32> to vector<32xf32>
    %23 = vector.extract_strided_slice %4 {offsets = [8, 0], sizes = [1, 32], strides = [1, 1]} : vector<9x128xf32> to vector<1x32xf32>
    %24 = vector.shape_cast %23 : vector<1x32xf32> to vector<32xf32>
    %25 = tpu.concatenate %2, %0 in 0 : vector<16x32xf32>, vector<16x32xf32> -> vector<32x32xf32>
    %cst = arith.constant dense<0.000000e+00> : vector<32x96xf32>
    %26 = tpu.matmul %25, %5, %cst {dimension_numbers = #tpu.dot_dimension_numbers<[1], [0], [0], [1], [0, 0, 1, 1], [], []>} : vector<32x32xf32>, vector<32x96xf32>, vector<32x96xf32> -> vector<32x96xf32>
    %27 = vector.extract_strided_slice %26 {offsets = [0, 0], sizes = [16, 64], strides = [1, 1]} : vector<32x96xf32> to vector<16x64xf32>
    %28 = vector.shape_cast %8 : vector<64xf32> to vector<1x64xf32>
    %29 = vector.broadcast %28 : vector<1x64xf32> to vector<16x64xf32>
    %30 = arith.addf %27, %29 : vector<16x64xf32>
    %31 = vector.extract_strided_slice %26 {offsets = [16, 64], sizes = [16, 32], strides = [1, 1]} : vector<32x96xf32> to vector<16x32xf32>
    %32 = vector.shape_cast %10 : vector<32xf32> to vector<1x32xf32>
    %33 = vector.broadcast %32 : vector<1x32xf32> to vector<16x32xf32>
    %34 = arith.addf %31, %33 : vector<16x32xf32>
    %35 = tpu.iota {dimensions = array<i32: 0>} : vector<16x16xi32>
    %c2_i32 = arith.constant 2 : i32
    %c0_i32 = arith.constant 0 : i32
    %36 = arith.cmpi eq, %c2_i32, %c0_i32 : i32
    %c1_i32 = arith.constant 1 : i32
    %37 = arith.select %36, %c1_i32, %c2_i32 : i32
    %38 = vector.broadcast %37 : i32 to vector<16x16xi32>
    %39 = arith.remsi %35, %38 : vector<16x16xi32>
    %c0_i32_7 = arith.constant 0 : i32
    %40 = vector.broadcast %c0_i32_7 : i32 to vector<16x16xi32>
    %41 = arith.cmpi ne, %39, %40 : vector<16x16xi32>
    %c0_i32_8 = arith.constant 0 : i32
    %42 = vector.broadcast %c0_i32_8 : i32 to vector<16x16xi32>
    %43 = arith.cmpi slt, %39, %42 : vector<16x16xi32>
    %c0_i32_9 = arith.constant 0 : i32
    %44 = arith.cmpi slt, %37, %c0_i32_9 : i32
    %45 = vector.broadcast %44 : i1 to vector<16x16xi1>
    %46 = vector.broadcast %45 : vector<16x16xi1> to vector<16x16xi1>
    %47 = arith.xori %43, %46 : vector<16x16xi1>
    %48 = arith.andi %47, %41 : vector<16x16xi1>
    %49 = vector.broadcast %37 : i32 to vector<16x16xi32>
    %50 = arith.addi %39, %49 : vector<16x16xi32>
    %51 = arith.select %48, %50, %39 : vector<16x16xi1>, vector<16x16xi32>
    %52 = tpu.iota {dimensions = array<i32: 1>} : vector<16x16xi32>
    %c2_i32_10 = arith.constant 2 : i32
    %c0_i32_11 = arith.constant 0 : i32
    %53 = arith.cmpi eq, %c2_i32_10, %c0_i32_11 : i32
    %c1_i32_12 = arith.constant 1 : i32
    %54 = arith.select %53, %c1_i32_12, %c2_i32_10 : i32
    %55 = vector.broadcast %54 : i32 to vector<16x16xi32>
    %56 = arith.remsi %52, %55 : vector<16x16xi32>
    %c0_i32_13 = arith.constant 0 : i32
    %57 = vector.broadcast %c0_i32_13 : i32 to vector<16x16xi32>
    %58 = arith.cmpi ne, %56, %57 : vector<16x16xi32>
    %c0_i32_14 = arith.constant 0 : i32
    %59 = vector.broadcast %c0_i32_14 : i32 to vector<16x16xi32>
    %60 = arith.cmpi slt, %56, %59 : vector<16x16xi32>
    %c0_i32_15 = arith.constant 0 : i32
    %61 = arith.cmpi slt, %54, %c0_i32_15 : i32
    %62 = vector.broadcast %61 : i1 to vector<16x16xi1>
    %63 = vector.broadcast %62 : vector<16x16xi1> to vector<16x16xi1>
    %64 = arith.xori %60, %63 : vector<16x16xi1>
    %65 = arith.andi %64, %58 : vector<16x16xi1>
    %66 = vector.broadcast %54 : i32 to vector<16x16xi32>
    %67 = arith.addi %56, %66 : vector<16x16xi32>
    %68 = arith.select %65, %67, %56 : vector<16x16xi1>, vector<16x16xi32>
    %69 = arith.cmpi eq, %51, %68 : vector<16x16xi32>
    %cst_16 = arith.constant 0.000000e+00 : f32
    %cst_17 = arith.constant -1.000000e+30 : f32
    %70 = vector.broadcast %cst_16 : f32 to vector<16x16xf32>
    %71 = vector.broadcast %cst_17 : f32 to vector<16x16xf32>
    %72 = arith.select %69, %70, %71 : vector<16x16xi1>, vector<16x16xf32>
    %73 = vector.extract_strided_slice %30 {offsets = [0, 0], sizes = [16, 8], strides = [1, 1]} : vector<16x64xf32> to vector<16x8xf32>
    %74 = vector.extract_strided_slice %30 {offsets = [0, 32], sizes = [16, 8], strides = [1, 1]} : vector<16x64xf32> to vector<16x8xf32>
    %75 = vector.extract_strided_slice %34 {offsets = [0, 0], sizes = [16, 8], strides = [1, 1]} : vector<16x32xf32> to vector<16x8xf32>
    %cst_18 = arith.constant dense<0.000000e+00> : vector<16x16xf32>
    %76 = tpu.matmul %73, %74, %cst_18 {dimension_numbers = #tpu.dot_dimension_numbers<[1], [1], [0], [0], [0, 0, 1, 0], [], []>} : vector<16x8xf32>, vector<16x8xf32>, vector<16x16xf32> -> vector<16x16xf32>
    %77 = arith.addf %76, %72 : vector<16x16xf32>
    %cst_19 = arith.constant dense<0xFF800000> : vector<16xf32>
    %78 = vector.multi_reduction <maximumf>, %77, %cst_19 [1] : vector<16x16xf32> to vector<16xf32>
    %79 = vector.shape_cast %78 : vector<16xf32> to vector<16x1xf32>
    %80 = vector.broadcast %79 : vector<16x1xf32> to vector<16x16xf32>
    %81 = arith.subf %77, %80 : vector<16x16xf32>
    %82 = math.exp %81 : vector<16x16xf32>
    %cst_20 = arith.constant dense<0.000000e+00> : vector<16xf32>
    %83 = vector.multi_reduction <add>, %82, %cst_20 [1] : vector<16x16xf32> to vector<16xf32>
    %84 = vector.shape_cast %83 : vector<16xf32> to vector<16x1xf32>
    %85 = tpu.reciprocal %84 {approx = true} : vector<16x1xf32> -> vector<16x1xf32>
    %86 = vector.broadcast %85 : vector<16x1xf32> to vector<16x16xf32>
    %87 = arith.mulf %82, %86 : vector<16x16xf32>
    %cst_21 = arith.constant dense<0.000000e+00> : vector<16x8xf32>
    %88 = tpu.matmul %87, %75, %cst_21 {dimension_numbers = #tpu.dot_dimension_numbers<[1], [0], [0], [1], [0, 0, 1, 1], [], []>} : vector<16x16xf32>, vector<16x8xf32>, vector<16x8xf32> -> vector<16x8xf32>
    %89 = vector.extract_strided_slice %30 {offsets = [0, 8], sizes = [16, 8], strides = [1, 1]} : vector<16x64xf32> to vector<16x8xf32>
    %90 = vector.extract_strided_slice %30 {offsets = [0, 40], sizes = [16, 8], strides = [1, 1]} : vector<16x64xf32> to vector<16x8xf32>
    %91 = vector.extract_strided_slice %34 {offsets = [0, 8], sizes = [16, 8], strides = [1, 1]} : vector<16x32xf32> to vector<16x8xf32>
    %cst_22 = arith.constant dense<0.000000e+00> : vector<16x16xf32>
    %92 = tpu.matmul %89, %90, %cst_22 {dimension_numbers = #tpu.dot_dimension_numbers<[1], [1], [0], [0], [0, 0, 1, 0], [], []>} : vector<16x8xf32>, vector<16x8xf32>, vector<16x16xf32> -> vector<16x16xf32>
    %93 = arith.addf %92, %72 : vector<16x16xf32>
    %cst_23 = arith.constant dense<0xFF800000> : vector<16xf32>
    %94 = vector.multi_reduction <maximumf>, %93, %cst_23 [1] : vector<16x16xf32> to vector<16xf32>
    %95 = vector.shape_cast %94 : vector<16xf32> to vector<16x1xf32>
    %96 = vector.broadcast %95 : vector<16x1xf32> to vector<16x16xf32>
    %97 = arith.subf %93, %96 : vector<16x16xf32>
    %98 = math.exp %97 : vector<16x16xf32>
    %cst_24 = arith.constant dense<0.000000e+00> : vector<16xf32>
    %99 = vector.multi_reduction <add>, %98, %cst_24 [1] : vector<16x16xf32> to vector<16xf32>
    %100 = vector.shape_cast %99 : vector<16xf32> to vector<16x1xf32>
    %101 = tpu.reciprocal %100 {approx = true} : vector<16x1xf32> -> vector<16x1xf32>
    %102 = vector.broadcast %101 : vector<16x1xf32> to vector<16x16xf32>
    %103 = arith.mulf %98, %102 : vector<16x16xf32>
    %cst_25 = arith.constant dense<0.000000e+00> : vector<16x8xf32>
    %104 = tpu.matmul %103, %91, %cst_25 {dimension_numbers = #tpu.dot_dimension_numbers<[1], [0], [0], [1], [0, 0, 1, 1], [], []>} : vector<16x16xf32>, vector<16x8xf32>, vector<16x8xf32> -> vector<16x8xf32>
    %105 = vector.extract_strided_slice %30 {offsets = [0, 16], sizes = [16, 8], strides = [1, 1]} : vector<16x64xf32> to vector<16x8xf32>
    %106 = vector.extract_strided_slice %30 {offsets = [0, 48], sizes = [16, 8], strides = [1, 1]} : vector<16x64xf32> to vector<16x8xf32>
    %107 = vector.extract_strided_slice %34 {offsets = [0, 16], sizes = [16, 8], strides = [1, 1]} : vector<16x32xf32> to vector<16x8xf32>
    %cst_26 = arith.constant dense<0.000000e+00> : vector<16x16xf32>
    %108 = tpu.matmul %105, %106, %cst_26 {dimension_numbers = #tpu.dot_dimension_numbers<[1], [1], [0], [0], [0, 0, 1, 0], [], []>} : vector<16x8xf32>, vector<16x8xf32>, vector<16x16xf32> -> vector<16x16xf32>
    %109 = arith.addf %108, %72 : vector<16x16xf32>
    %cst_27 = arith.constant dense<0xFF800000> : vector<16xf32>
    %110 = vector.multi_reduction <maximumf>, %109, %cst_27 [1] : vector<16x16xf32> to vector<16xf32>
    %111 = vector.shape_cast %110 : vector<16xf32> to vector<16x1xf32>
    %112 = vector.broadcast %111 : vector<16x1xf32> to vector<16x16xf32>
    %113 = arith.subf %109, %112 : vector<16x16xf32>
    %114 = math.exp %113 : vector<16x16xf32>
    %cst_28 = arith.constant dense<0.000000e+00> : vector<16xf32>
    %115 = vector.multi_reduction <add>, %114, %cst_28 [1] : vector<16x16xf32> to vector<16xf32>
    %116 = vector.shape_cast %115 : vector<16xf32> to vector<16x1xf32>
    %117 = tpu.reciprocal %116 {approx = true} : vector<16x1xf32> -> vector<16x1xf32>
    %118 = vector.broadcast %117 : vector<16x1xf32> to vector<16x16xf32>
    %119 = arith.mulf %114, %118 : vector<16x16xf32>
    %cst_29 = arith.constant dense<0.000000e+00> : vector<16x8xf32>
    %120 = tpu.matmul %119, %107, %cst_29 {dimension_numbers = #tpu.dot_dimension_numbers<[1], [0], [0], [1], [0, 0, 1, 1], [], []>} : vector<16x16xf32>, vector<16x8xf32>, vector<16x8xf32> -> vector<16x8xf32>
    %121 = vector.extract_strided_slice %30 {offsets = [0, 24], sizes = [16, 8], strides = [1, 1]} : vector<16x64xf32> to vector<16x8xf32>
    %122 = vector.extract_strided_slice %30 {offsets = [0, 56], sizes = [16, 8], strides = [1, 1]} : vector<16x64xf32> to vector<16x8xf32>
    %123 = vector.extract_strided_slice %34 {offsets = [0, 24], sizes = [16, 8], strides = [1, 1]} : vector<16x32xf32> to vector<16x8xf32>
    %cst_30 = arith.constant dense<0.000000e+00> : vector<16x16xf32>
    %124 = tpu.matmul %121, %122, %cst_30 {dimension_numbers = #tpu.dot_dimension_numbers<[1], [1], [0], [0], [0, 0, 1, 0], [], []>} : vector<16x8xf32>, vector<16x8xf32>, vector<16x16xf32> -> vector<16x16xf32>
    %125 = arith.addf %124, %72 : vector<16x16xf32>
    %cst_31 = arith.constant dense<0xFF800000> : vector<16xf32>
    %126 = vector.multi_reduction <maximumf>, %125, %cst_31 [1] : vector<16x16xf32> to vector<16xf32>
    %127 = vector.shape_cast %126 : vector<16xf32> to vector<16x1xf32>
    %128 = vector.broadcast %127 : vector<16x1xf32> to vector<16x16xf32>
    %129 = arith.subf %125, %128 : vector<16x16xf32>
    %130 = math.exp %129 : vector<16x16xf32>
    %cst_32 = arith.constant dense<0.000000e+00> : vector<16xf32>
    %131 = vector.multi_reduction <add>, %130, %cst_32 [1] : vector<16x16xf32> to vector<16xf32>
    %132 = vector.shape_cast %131 : vector<16xf32> to vector<16x1xf32>
    %133 = tpu.reciprocal %132 {approx = true} : vector<16x1xf32> -> vector<16x1xf32>
    %134 = vector.broadcast %133 : vector<16x1xf32> to vector<16x16xf32>
    %135 = arith.mulf %130, %134 : vector<16x16xf32>
    %cst_33 = arith.constant dense<0.000000e+00> : vector<16x8xf32>
    %136 = tpu.matmul %135, %123, %cst_33 {dimension_numbers = #tpu.dot_dimension_numbers<[1], [0], [0], [1], [0, 0, 1, 1], [], []>} : vector<16x16xf32>, vector<16x8xf32>, vector<16x8xf32> -> vector<16x8xf32>
    %137 = tpu.concatenate %88, %104, %120, %136 in 1 : vector<16x8xf32>, vector<16x8xf32>, vector<16x8xf32>, vector<16x8xf32> -> vector<16x32xf32>
    %cst_34 = arith.constant dense<0.000000e+00> : vector<16x32xf32>
    %138 = tpu.matmul %137, %6, %cst_34 {dimension_numbers = #tpu.dot_dimension_numbers<[1], [0], [0], [1], [0, 0, 1, 1], [], []>} : vector<16x32xf32>, vector<32x32xf32>, vector<16x32xf32> -> vector<16x32xf32>
    %139 = vector.shape_cast %12 : vector<32xf32> to vector<1x32xf32>
    %140 = vector.broadcast %139 : vector<1x32xf32> to vector<16x32xf32>
    %141 = arith.addf %138, %140 : vector<16x32xf32>
    %142 = arith.addf %0, %141 : vector<16x32xf32>
    %cst_35 = arith.constant dense<0.000000e+00> : vector<16xf32>
    %143 = vector.multi_reduction <add>, %142, %cst_35 [1] : vector<16x32xf32> to vector<16xf32>
    %144 = vector.shape_cast %143 : vector<16xf32> to vector<16x1xf32>
    %cst_36 = arith.constant 3.200000e+01 : f32
    %145 = vector.broadcast %cst_36 : f32 to vector<16x1xf32>
    %146 = arith.divf %144, %145 : vector<16x1xf32>
    %147 = arith.mulf %142, %142 : vector<16x32xf32>
    %cst_37 = arith.constant dense<0.000000e+00> : vector<16xf32>
    %148 = vector.multi_reduction <add>, %147, %cst_37 [1] : vector<16x32xf32> to vector<16xf32>
    %149 = vector.shape_cast %148 : vector<16xf32> to vector<16x1xf32>
    %cst_38 = arith.constant 3.200000e+01 : f32
    %150 = vector.broadcast %cst_38 : f32 to vector<16x1xf32>
    %151 = arith.divf %149, %150 : vector<16x1xf32>
    %152 = arith.mulf %146, %146 : vector<16x1xf32>
    %153 = arith.subf %151, %152 : vector<16x1xf32>
    %154 = vector.broadcast %146 : vector<16x1xf32> to vector<16x32xf32>
    %155 = arith.subf %142, %154 : vector<16x32xf32>
    %cst_39 = arith.constant 9.99999974E-6 : f32
    %156 = vector.broadcast %cst_39 : f32 to vector<16x1xf32>
    %157 = arith.addf %153, %156 : vector<16x1xf32>
    %158 = math.rsqrt %157 : vector<16x1xf32>
    %159 = vector.broadcast %158 : vector<16x1xf32> to vector<16x32xf32>
    %160 = arith.mulf %155, %159 : vector<16x32xf32>
    %161 = vector.shape_cast %18 : vector<32xf32> to vector<1x32xf32>
    %162 = vector.broadcast %161 : vector<1x32xf32> to vector<16x32xf32>
    %163 = arith.mulf %160, %162 : vector<16x32xf32>
    %164 = vector.shape_cast %20 : vector<32xf32> to vector<1x32xf32>
    %165 = vector.broadcast %164 : vector<1x32xf32> to vector<16x32xf32>
    %166 = arith.addf %163, %165 : vector<16x32xf32>
    %c0_40 = arith.constant 0 : index
    %c0_41 = arith.constant 0 : index
    %167 = vector.load %arg3[%c0_40, %c0_41] : memref<32x64xf32, #tpu.memory_space<vmem>>, vector<32x64xf32>
    %cst_42 = arith.constant dense<0.000000e+00> : vector<16x64xf32>
    %168 = tpu.matmul %166, %167, %cst_42 {dimension_numbers = #tpu.dot_dimension_numbers<[1], [0], [0], [1], [0, 0, 1, 1], [], []>} : vector<16x32xf32>, vector<32x64xf32>, vector<16x64xf32> -> vector<16x64xf32>
    %169 = vector.shape_cast %14 : vector<64xf32> to vector<1x64xf32>
    %170 = vector.broadcast %169 : vector<1x64xf32> to vector<16x64xf32>
    %171 = arith.addf %168, %170 : vector<16x64xf32>
    %cst_43 = arith.constant 0.000000e+00 : f32
    %172 = vector.broadcast %cst_43 : f32 to vector<16x64xf32>
    %173 = arith.maximumf %171, %172 : vector<16x64xf32>
    %c0_44 = arith.constant 0 : index
    %c0_45 = arith.constant 0 : index
    %174 = vector.load %arg4[%c0_44, %c0_45] : memref<64x32xf32, #tpu.memory_space<vmem>>, vector<64x32xf32>
    %cst_46 = arith.constant dense<0.000000e+00> : vector<16x32xf32>
    %175 = tpu.matmul %173, %174, %cst_46 {dimension_numbers = #tpu.dot_dimension_numbers<[1], [0], [0], [1], [0, 0, 1, 1], [], []>} : vector<16x64xf32>, vector<64x32xf32>, vector<16x32xf32> -> vector<16x32xf32>
    %176 = vector.shape_cast %16 : vector<32xf32> to vector<1x32xf32>
    %177 = vector.broadcast %176 : vector<1x32xf32> to vector<16x32xf32>
    %178 = arith.addf %175, %177 : vector<16x32xf32>
    %179 = arith.addf %166, %178 : vector<16x32xf32>
    %cst_47 = arith.constant dense<0.000000e+00> : vector<16xf32>
    %180 = vector.multi_reduction <add>, %179, %cst_47 [1] : vector<16x32xf32> to vector<16xf32>
    %181 = vector.shape_cast %180 : vector<16xf32> to vector<16x1xf32>
    %cst_48 = arith.constant 3.200000e+01 : f32
    %182 = vector.broadcast %cst_48 : f32 to vector<16x1xf32>
    %183 = arith.divf %181, %182 : vector<16x1xf32>
    %184 = arith.mulf %179, %179 : vector<16x32xf32>
    %cst_49 = arith.constant dense<0.000000e+00> : vector<16xf32>
    %185 = vector.multi_reduction <add>, %184, %cst_49 [1] : vector<16x32xf32> to vector<16xf32>
    %186 = vector.shape_cast %185 : vector<16xf32> to vector<16x1xf32>
    %cst_50 = arith.constant 3.200000e+01 : f32
    %187 = vector.broadcast %cst_50 : f32 to vector<16x1xf32>
    %188 = arith.divf %186, %187 : vector<16x1xf32>
    %189 = arith.mulf %183, %183 : vector<16x1xf32>
    %190 = arith.subf %188, %189 : vector<16x1xf32>
    %191 = vector.broadcast %183 : vector<16x1xf32> to vector<16x32xf32>
    %192 = arith.subf %179, %191 : vector<16x32xf32>
    %cst_51 = arith.constant 9.99999974E-6 : f32
    %193 = vector.broadcast %cst_51 : f32 to vector<16x1xf32>
    %194 = arith.addf %190, %193 : vector<16x1xf32>
    %195 = math.rsqrt %194 : vector<16x1xf32>
    %196 = vector.broadcast %195 : vector<16x1xf32> to vector<16x32xf32>
    %197 = arith.mulf %192, %196 : vector<16x32xf32>
    %198 = vector.shape_cast %22 : vector<32xf32> to vector<1x32xf32>
    %199 = vector.broadcast %198 : vector<1x32xf32> to vector<16x32xf32>
    %200 = arith.mulf %197, %199 : vector<16x32xf32>
    %201 = vector.shape_cast %24 : vector<32xf32> to vector<1x32xf32>
    %202 = vector.broadcast %201 : vector<1x32xf32> to vector<16x32xf32>
    %203 = arith.addf %200, %202 : vector<16x32xf32>
    %c0_52 = arith.constant 0 : index
    %c0_53 = arith.constant 0 : index
    %204 = vector.load %arg6[%c0_52, %c0_53] : memref<16x32xf32, #tpu.memory_space<vmem>>, vector<16x32xf32>
    tpu.vector_store %arg6[%c0_52, %c0_53], %203 {strides = array<i32>} : memref<16x32xf32, #tpu.memory_space<vmem>>, vector<16x32xf32>,
    return
  }
}

</mosaic_0001>

<llo_original>
// kernel: transformer_encoder_layer.1
$region0: #{transformer_encoder_layer.1}
  #allocation0 [shape = 'u32[]', space=smem, size = 0x4, offset = 0x4, fixed_abs, tag = 'smem constant byte address 0x4 - core index']
  #allocation1 [shape = 'u32[72,128]{1,0:T(1,128)}', space=vmem, size = 0x9000, scoped, tag = 'internal scratch']
  %s0 = inlined_call_operand.vmem [shape: f32[16,32], index: 0, kind: input, shape index: {}]
  %s1 = inlined_call_operand.vmem [shape: f32[16,32], index: 1, kind: input, shape index: {}]
  %s2 = inlined_call_operand.vmem [shape: f32[32,128], index: 2, kind: input, shape index: {}]
  %s3 = inlined_call_operand.vmem [shape: f32[32,64], index: 3, kind: input, shape index: {}]
  %s4 = inlined_call_operand.vmem [shape: f32[64,32], index: 4, kind: input, shape index: {}]
  %s5 = inlined_call_operand.hbm [shape: f32[9,128], index: 5, kind: input, shape index: {}]
  %s6 = inlined_call_operand.hbm [shape: f32[16,32], index: 6, kind: output, shape index: {}]
  %s7 = sld [smem:[#allocation0]]
  $region38: #{transformer_encoder_layer.1} parent=0
    _
  %s9 = ssub.s32 1, %s7
  %s10 = scalar_select 0, %s9, %s7
  $region1: #{transformer_encoder_layer.1} parent=0
    #allocation2 [shape = 'u8[8192]{0}', space=vmem, size = 0x2000, scoped, tag = 'input window, operand 5, single buffered']
    #allocation3 [shape = 's32[1]{0}', space=sflag, size = 0x4, scoped, tag = 'scoped memory for transformer_encoder_layer.1']
    #allocation4 [shape = 's32[1]{0}', space=sflag, size = 0x4, scoped, tag = 'scoped memory for transformer_encoder_layer.1']
    #allocation5 [shape = 'u8[8192]{0}', space=vmem, size = 0x2000, scoped, tag = 'output window, operand 0, single buffered']
    %11 = vsyncpa [#allocation3], 0
    %12 = vsyncpa [#allocation4], 0
    // Predicated region
    $region2: #{transformer_encoder_layer.1} parent=1 // pred_check
      _
    $region3: #{transformer_encoder_layer.1} parent=1 // pred_check_branch
      %14 = sbr.rel (0) target = $region5
    $region4: #{transformer_encoder_layer.1} parent=1 // pred_region
      _
    $region5: #{transformer_encoder_layer.1} parent=1 // pred_fallthru
      _
    // Predicated region
    $region6: #{transformer_encoder_layer.1} parent=1 // pred_check
      _
    $region7: #{transformer_encoder_layer.1} parent=1 // pred_check_branch
      %16 = sbr.rel (0) target = $region9
    $region8: #{transformer_encoder_layer.1} parent=1 // pred_region
      _
    $region9: #{transformer_encoder_layer.1} parent=1 // pred_fallthru
      _
    // Predicated region
    $region10: #{transformer_encoder_layer.1} parent=1 // pred_check
      _
    $region11: #{transformer_encoder_layer.1} parent=1 // pred_check_branch
      %18 = sbr.rel (0) target = $region13
    $region12: #{transformer_encoder_layer.1} parent=1 // pred_region
      _
    $region13: #{transformer_encoder_layer.1} parent=1 // pred_fallthru
      _
    // Predicated region
    $region14: #{transformer_encoder_layer.1} parent=1 // pred_check
      _
    $region15: #{transformer_encoder_layer.1} parent=1 // pred_check_branch
      %20 = sbr.rel (0) target = $region17
    $region16: #{transformer_encoder_layer.1} parent=1 // pred_region
      _
    $region17: #{transformer_encoder_layer.1} parent=1 // pred_fallthru
      _
    // Predicated region
    $region18: #{transformer_encoder_layer.1} parent=1 // pred_check
      _
    $region19: #{transformer_encoder_layer.1} parent=1 // pred_check_branch
      %22 = sbr.rel (0) target = $region21
    $region20: #{transformer_encoder_layer.1} parent=1 // pred_region
      _
    $region21: #{transformer_encoder_layer.1} parent=1 // pred_fallthru
      _
    // Predicated region
    $region22: #{transformer_encoder_layer.1} parent=1 // pred_check
      _
    $region23: #{transformer_encoder_layer.1} parent=1 // pred_check_branch
      %24 = sbr.rel (0) target = $region25
    $region24: #{transformer_encoder_layer.1} parent=1 // pred_region
      %26 = vsyncadd [#allocation3], 0
      %s27 = sshll.u32 %s5, 4
      %s28 = int_to_ptr.hbm [resolvable:$true] %s27
      %s29 = sshll.u32 [#allocation2], 4
      %s30 = int_to_ptr.vmem [resolvable:$true] %s29
      %35 = dma.hbm_to_vmem [thread:$0]  %s28, 256, %s30, [#allocation3], 128, 128, 8
    $region25: #{transformer_encoder_layer.1} parent=1 // pred_fallthru
      _
    // Predicated region
    $region26: #{transformer_encoder_layer.1} parent=1 // pred_check
      _
    $region27: #{transformer_encoder_layer.1} parent=1 // pred_check_branch
      %37 = sbr.rel (0) target = $region29
    $region28: #{transformer_encoder_layer.1} parent=1 // pred_region
      %39 = dma.done [#allocation3], 256
    $region29: #{transformer_encoder_layer.1} parent=1 // pred_fallthru
      _
    %v40 = vld [vmem:[%s0] sm:$0xff]
    %v41 = vld [vmem:[%s0 + $0x8] sm:$0xff]
    %v42 = vld [vmem:[%s1] sm:$0xff]
    %v43 = vld [vmem:[%s1 + $0x8] sm:$0xff]
    %v44 = vadd.f32 %v40, %v42
    %v45 = vadd.f32 %v41, %v43
    %v46 = vld [vmem:[%s2] sm:$0xff]
    %v47 = vld [vmem:[%s2 + $0x8] sm:$0xff]
    %v48 = vld [vmem:[%s2 + $0x10] sm:$0xff]
    %v49 = vld [vmem:[%s2 + $0x18] sm:$0xff]
    %v50 = vld [vmem:[#allocation2] sm:$0xff]
    %v51 = vld [vmem:[#allocation2 + $0x8] sm:$0x1]
    %vm52 = vcmask 261120
    %v54 = vsel %vm52, %v44, 0
    %v57 = vsel %vm52, %v45, 0
    %v60 = vsel %vm52, %v40, 0
    %v63 = vsel %vm52, %v41, 0
    %65 = vmatpush.msra.mxu0 0.0
    %66 = vmatpush.msra.mxu0 0.0
    %67 = vmatpush.msra.mxu0 0.0
    %68 = vmatpush.msra.mxu0 0.0
    %69 = vmatpush.msra.mxu0 0.0
    %70 = vmatpush.msra.mxu0 0.0
    %71 = vmatpush.msra.mxu0 0.0
    %72 = vmatpush.msra.mxu0 0.0
    %73 = vmatpush.msra.mxu0 0.0
    %74 = vmatpush.msra.mxu0 0.0
    %75 = vmatpush.msra.mxu0 0.0
    %76 = vmatpush.msra.mxu0 0.0
    %77 = vmatpush.msra.mxu0 %v49
    %78 = vmatpush.msra.mxu0 %v48
    %79 = vmatpush.msra.mxu0 %v47
    %80 = vmatpush.msra.mxu0 %v46
    %81 = vmatmul.f32.gmra.mxu0 %v54
    %v82 = vpop.f32.mrf.mxu0
    %v83 = vadd.f32 0.0, %v82
    %84 = vmatmul.f32.gmra.mxu0 %v57
    %v85 = vpop.f32.mrf.mxu0
    %v86 = vadd.f32 0.0, %v85
    %87 = vmatmul.f32.gmra.mxu0 %v60
    %v88 = vpop.f32.mrf.mxu0
    %v89 = vadd.f32 0.0, %v88
    %90 = vmatmul.f32.gmra.mxu0 %v63
    %v91 = vpop.f32.mrf.mxu0
    %v92 = vadd.f32 0.0, %v91
    %93 = vdwg.mxu0
    %v94 = vperm.slane %v50, 0
    %v95 = vadd.f32 %v83, %v94
    %v96 = vadd.f32 %v86, %v94
    %v97 = vperm.slane %v50, 1
    %99 = vrot.lane.b32.xlu0 %v97, 64
    %v100 = vpop.permute.xlu0 %99
    %v102 = vadd.f32 %v89, %v100
    %v103 = vadd.f32 %v92, %v100
    %v104 = vlaneseq
    %v105 = vshrl.u32 %v104, 7
    %v106 = vadd.s32 %v105, 8
    %vm107 = vcmp.lt.s32.totalorder %v105, 0
    %v108 = vsub.s32 0, %v105
    %v109 = vsel %vm107, %v108, %v105
    %v110 = vshrl.u32 %v109, 1
    %v111 = vand.u32 %v109, 1
    %v112 = vsub.s32 0, %v111
    %v113 = vsel %vm107, %v112, %v111
    %vm114 = vcmp.lt.s32.totalorder %v106, 0
    %v115 = vsub.s32 0, %v106
    %v116 = vsel %vm114, %v115, %v106
    %v117 = vshrl.u32 %v116, 1
    %v118 = vand.u32 %v116, 1
    %v119 = vsub.s32 0, %v118
    %v120 = vsel %vm114, %v119, %v118
    %vm121 = vcmp.ne.s32.totalorder %v113, 0
    %vm122 = vcmp.ne.s32.totalorder %v120, 0
    %vm123 = vcmp.lt.s32.totalorder %v113, 0
    %vm124 = vcmp.lt.s32.totalorder %v120, 0
    %vm125 = vmand %vm123, %vm121
    %vm126 = vmand %vm124, %vm122
    %v127 = vadd.s32 %v113, 2
    %v128 = vadd.s32 %v120, 2
    %v129 = vsel %vm125, %v127, %v113
    %v130 = vsel %vm126, %v128, %v120
    %v131 = vlaneseq
    %v132 = vand.u32 %v131, 127
    %vm133 = vcmp.lt.s32.totalorder %v132, 0
    %v134 = vsub.s32 0, %v132
    %v135 = vsel %vm133, %v134, %v132
    %v136 = vshrl.u32 %v135, 1
    %v137 = vand.u32 %v135, 1
    %v138 = vsub.s32 0, %v137
    %v139 = vsel %vm133, %v138, %v137
    %vm140 = vcmp.ne.s32.totalorder %v139, 0
    %vm141 = vcmp.lt.s32.totalorder %v139, 0
    %vm142 = vmand %vm141, %vm140
    %v143 = vadd.s32 %v139, 2
    %v144 = vsel %vm142, %v143, %v139
    %vm145 = vcmp.eq.s32.totalorder %v129, %v144
    %vm146 = vcmp.eq.s32.totalorder %v130, %v144
    %v147 = vsel %vm145, 0.0, -1e+30
    %v148 = vsel %vm146, 0.0, -1e+30
    %151 = vrot.lane.b32.xlu0 %v95, 96
    %v152 = vpop.permute.xlu0 %151
    %153 = vrot.lane.b32.xlu0 %v96, 96
    %v154 = vpop.permute.xlu0 %153
    %vm155 = vcmask 64512
    %v156 = vsel %vm155, %v95, 0
    %v158 = vsel %vm155, %v96, 0
    %v160 = vsel %vm155, %v152, 0
    %v162 = vsel %vm155, %v154, 0
    %164 = vmatpush.xpose.msra.mxu0 0.0
    %165 = vmatpush.xpose.msra.mxu0 0.0
    %166 = vmatpush.xpose.msra.mxu0 0.0
    %167 = vmatpush.xpose.msra.mxu0 0.0
    %168 = vmatpush.xpose.msra.mxu0 0.0
    %169 = vmatpush.xpose.msra.mxu0 0.0
    %170 = vmatpush.xpose.msra.mxu0 0.0
    %171 = vmatpush.xpose.msra.mxu0 0.0
    %172 = vmatpush.xpose.msra.mxu0 0.0
    %173 = vmatpush.xpose.msra.mxu0 0.0
    %174 = vmatpush.xpose.msra.mxu0 0.0
    %175 = vmatpush.xpose.msra.mxu0 0.0
    %176 = vmatpush.xpose.msra.mxu0 0.0
    %177 = vmatpush.xpose.msra.mxu0 0.0
    %178 = vmatpush.xpose.msra.mxu0 %v162
    %179 = vmatpush.xpose.msra.mxu0 %v160
    %180 = vmatmul.f32.gmra.mxu0 %v156
    %v181 = vpop.f32.mrf.mxu0
    %v182 = vadd.f32 %v147, %v181
    %183 = vmatmul.f32.gmra.mxu0 %v158
    %v184 = vpop.f32.mrf.mxu0
    %v185 = vadd.f32 %v148, %v184
    %186 = vdwg.mxu0
    %vm187 = vcmask 130048
    %v188 = vsel %vm187, %v182, -inf
    %189 = vmax.xlane.f32.xlu0 %v188
    %v190 = vpop.xlane.xlu0 %189
    %v191 = vsel %vm187, %v185, -inf
    %192 = vmax.xlane.f32.xlu0 %v191
    %v193 = vpop.xlane.xlu0 %192
    %v194 = vsub.f32 %v182, %v190
    %v195 = vsub.f32 %v185, %v193
    %v196 = vmul.f32 %v194, 1.442695
    %v197 = vpow.pop %v196
    %v198 = vmul.f32 %v195, 1.442695
    %v199 = vpow.pop %v198
    %v200 = vsel %vm187, %v197, 0.0
    %201 = vadd.xlane.f32.xlu0 %v200
    %v202 = vpop.xlane.xlu0 %201
    %v203 = vsel %vm187, %v199, 0.0
    %204 = vadd.xlane.f32.xlu0 %v203
    %v205 = vpop.xlane.xlu0 %204
    %v206 = vrcp.pop %v202
    %v207 = vrcp.pop %v205
    %v208 = vmul.f32 %v197, %v206
    %v209 = vmul.f32 %v199, %v207
    %212 = vrot.lane.b32.xlu0 %v102, 64
    %v213 = vpop.permute.xlu0 %212
    %214 = vrot.lane.b32.xlu0 %v103, 64
    %v215 = vpop.permute.xlu0 %214
    %v219 = vsel %vm187, %v208, 0
    %v222 = vsel %vm187, %v209, 0
    %224 = vmatpush.msra.mxu0 0.0
    %225 = vmatpush.msra.mxu0 0.0
    %226 = vmatpush.msra.mxu0 0.0
    %227 = vmatpush.msra.mxu0 0.0
    %228 = vmatpush.msra.mxu0 0.0
    %229 = vmatpush.msra.mxu0 0.0
    %230 = vmatpush.msra.mxu0 0.0
    %231 = vmatpush.msra.mxu0 0.0
    %232 = vmatpush.msra.mxu0 0.0
    %233 = vmatpush.msra.mxu0 0.0
    %234 = vmatpush.msra.mxu0 0.0
    %235 = vmatpush.msra.mxu0 0.0
    %236 = vmatpush.msra.mxu0 0.0
    %237 = vmatpush.msra.mxu0 0.0
    %238 = vmatpush.msra.mxu0 %v215
    %239 = vmatpush.msra.mxu0 %v213
    %240 = vmatmul.f32.gmra.mxu0 %v219
    %v241 = vpop.f32.mrf.mxu0
    %v242 = vadd.f32 0.0, %v241
    %243 = vmatmul.f32.gmra.mxu0 %v222
    %v244 = vpop.f32.mrf.mxu0
    %v245 = vadd.f32 0.0, %v244
    %246 = vdwg.mxu0
    %247 = vrot.lane.b32.xlu0 %v95, 120
    %v248 = vpop.permute.xlu0 %247
    %249 = vrot.lane.b32.xlu0 %v96, 120
    %v250 = vpop.permute.xlu0 %249
    %251 = vrot.lane.b32.xlu0 %v95, 88
    %v252 = vpop.permute.xlu0 %251
    %253 = vrot.lane.b32.xlu0 %v96, 88
    %v254 = vpop.permute.xlu0 %253
    %v255 = vsel %vm155, %v248, 0
    %v257 = vsel %vm155, %v250, 0
    %v259 = vsel %vm155, %v252, 0
    %v261 = vsel %vm155, %v254, 0
    %263 = vmatpush.xpose.msra.mxu0 0.0
    %264 = vmatpush.xpose.msra.mxu0 0.0
    %265 = vmatpush.xpose.msra.mxu0 0.0
    %266 = vmatpush.xpose.msra.mxu0 0.0
    %267 = vmatpush.xpose.msra.mxu0 0.0
    %268 = vmatpush.xpose.msra.mxu0 0.0
    %269 = vmatpush.xpose.msra.mxu0 0.0
    %270 = vmatpush.xpose.msra.mxu0 0.0
    %271 = vmatpush.xpose.msra.mxu0 0.0
    %272 = vmatpush.xpose.msra.mxu0 0.0
    %273 = vmatpush.xpose.msra.mxu0 0.0
    %274 = vmatpush.xpose.msra.mxu0 0.0
    %275 = vmatpush.xpose.msra.mxu0 0.0
    %276 = vmatpush.xpose.msra.mxu0 0.0
    %277 = vmatpush.xpose.msra.mxu0 %v261
    %278 = vmatpush.xpose.msra.mxu0 %v259
    %279 = vmatmul.f32.gmra.mxu0 %v255
    %v280 = vpop.f32.mrf.mxu0
    %v281 = vadd.f32 %v147, %v280
    %282 = vmatmul.f32.gmra.mxu0 %v257
    %v283 = vpop.f32.mrf.mxu0
    %v284 = vadd.f32 %v148, %v283
    %285 = vdwg.mxu0
    %v286 = vsel %vm187, %v281, -inf
    %287 = vmax.xlane.f32.xlu0 %v286
    %v288 = vpop.xlane.xlu0 %287
    %v289 = vsel %vm187, %v284, -inf
    %290 = vmax.xlane.f32.xlu0 %v289
    %v291 = vpop.xlane.xlu0 %290
    %v292 = vsub.f32 %v281, %v288
    %v293 = vsub.f32 %v284, %v291
    %v294 = vmul.f32 %v292, 1.442695
    %v295 = vpow.pop %v294
    %v296 = vmul.f32 %v293, 1.442695
    %v297 = vpow.pop %v296
    %v298 = vsel %vm187, %v295, 0.0
    %299 = vadd.xlane.f32.xlu0 %v298
    %v300 = vpop.xlane.xlu0 %299
    %v301 = vsel %vm187, %v297, 0.0
    %302 = vadd.xlane.f32.xlu0 %v301
    %v303 = vpop.xlane.xlu0 %302
    %v304 = vrcp.pop %v300
    %v305 = vrcp.pop %v303
    %v306 = vmul.f32 %v295, %v304
    %v307 = vmul.f32 %v297, %v305
    %308 = vrot.lane.b32.xlu0 %v102, 56
    %v309 = vpop.permute.xlu0 %308
    %310 = vrot.lane.b32.xlu0 %v103, 56
    %v311 = vpop.permute.xlu0 %310
    %v315 = vsel %vm187, %v306, 0
    %v318 = vsel %vm187, %v307, 0
    %320 = vmatpush.msra.mxu0 0.0
    %321 = vmatpush.msra.mxu0 0.0
    %322 = vmatpush.msra.mxu0 0.0
    %323 = vmatpush.msra.mxu0 0.0
    %324 = vmatpush.msra.mxu0 0.0
    %325 = vmatpush.msra.mxu0 0.0
    %326 = vmatpush.msra.mxu0 0.0
    %327 = vmatpush.msra.mxu0 0.0
    %328 = vmatpush.msra.mxu0 0.0
    %329 = vmatpush.msra.mxu0 0.0
    %330 = vmatpush.msra.mxu0 0.0
    %331 = vmatpush.msra.mxu0 0.0
    %332 = vmatpush.msra.mxu0 0.0
    %333 = vmatpush.msra.mxu0 0.0
    %334 = vmatpush.msra.mxu0 %v311
    %335 = vmatpush.msra.mxu0 %v309
    %336 = vmatmul.f32.gmra.mxu0 %v315
    %v337 = vpop.f32.mrf.mxu0
    %v338 = vadd.f32 0.0, %v337
    %339 = vmatmul.f32.gmra.mxu0 %v318
    %v340 = vpop.f32.mrf.mxu0
    %v341 = vadd.f32 0.0, %v340
    %342 = vdwg.mxu0
    %343 = vrot.lane.b32.xlu0 %v95, 112
    %v344 = vpop.permute.xlu0 %343
    %345 = vrot.lane.b32.xlu0 %v96, 112
    %v346 = vpop.permute.xlu0 %345
    %347 = vrot.lane.b32.xlu0 %v95, 80
    %v348 = vpop.permute.xlu0 %347
    %349 = vrot.lane.b32.xlu0 %v96, 80
    %v350 = vpop.permute.xlu0 %349
    %v351 = vsel %vm155, %v344, 0
    %v353 = vsel %vm155, %v346, 0
    %v355 = vsel %vm155, %v348, 0
    %v357 = vsel %vm155, %v350, 0
    %359 = vmatpush.xpose.msra.mxu0 0.0
    %360 = vmatpush.xpose.msra.mxu0 0.0
    %361 = vmatpush.xpose.msra.mxu0 0.0
    %362 = vmatpush.xpose.msra.mxu0 0.0
    %363 = vmatpush.xpose.msra.mxu0 0.0
    %364 = vmatpush.xpose.msra.mxu0 0.0
    %365 = vmatpush.xpose.msra.mxu0 0.0
    %366 = vmatpush.xpose.msra.mxu0 0.0
    %367 = vmatpush.xpose.msra.mxu0 0.0
    %368 = vmatpush.xpose.msra.mxu0 0.0
    %369 = vmatpush.xpose.msra.mxu0 0.0
    %370 = vmatpush.xpose.msra.mxu0 0.0
    %371 = vmatpush.xpose.msra.mxu0 0.0
    %372 = vmatpush.xpose.msra.mxu0 0.0
    %373 = vmatpush.xpose.msra.mxu0 %v357
    %374 = vmatpush.xpose.msra.mxu0 %v355
    %375 = vmatmul.f32.gmra.mxu0 %v351
    %v376 = vpop.f32.mrf.mxu0
    %v377 = vadd.f32 %v147, %v376
    %378 = vmatmul.f32.gmra.mxu0 %v353
    %v379 = vpop.f32.mrf.mxu0
    %v380 = vadd.f32 %v148, %v379
    %381 = vdwg.mxu0
    %v382 = vsel %vm187, %v377, -inf
    %383 = vmax.xlane.f32.xlu0 %v382
    %v384 = vpop.xlane.xlu0 %383
    %v385 = vsel %vm187, %v380, -inf
    %386 = vmax.xlane.f32.xlu0 %v385
    %v387 = vpop.xlane.xlu0 %386
    %v388 = vsub.f32 %v377, %v384
    %v389 = vsub.f32 %v380, %v387
    %v390 = vmul.f32 %v388, 1.442695
    %v391 = vpow.pop %v390
    %v392 = vmul.f32 %v389, 1.442695
    %v393 = vpow.pop %v392
    %v394 = vsel %vm187, %v391, 0.0
    %395 = vadd.xlane.f32.xlu0 %v394
    %v396 = vpop.xlane.xlu0 %395
    %v397 = vsel %vm187, %v393, 0.0
    %398 = vadd.xlane.f32.xlu0 %v397
    %v399 = vpop.xlane.xlu0 %398
    %v400 = vrcp.pop %v396
    %v401 = vrcp.pop %v399
    %v402 = vmul.f32 %v391, %v400
    %v403 = vmul.f32 %v393, %v401
    %404 = vrot.lane.b32.xlu0 %v102, 48
    %v405 = vpop.permute.xlu0 %404
    %406 = vrot.lane.b32.xlu0 %v103, 48
    %v407 = vpop.permute.xlu0 %406
    %v411 = vsel %vm187, %v402, 0
    %v414 = vsel %vm187, %v403, 0
    %416 = vmatpush.msra.mxu0 0.0
    %417 = vmatpush.msra.mxu0 0.0
    %418 = vmatpush.msra.mxu0 0.0
    %419 = vmatpush.msra.mxu0 0.0
    %420 = vmatpush.msra.mxu0 0.0
    %421 = vmatpush.msra.mxu0 0.0
    %422 = vmatpush.msra.mxu0 0.0
    %423 = vmatpush.msra.mxu0 0.0
    %424 = vmatpush.msra.mxu0 0.0
    %425 = vmatpush.msra.mxu0 0.0
    %426 = vmatpush.msra.mxu0 0.0
    %427 = vmatpush.msra.mxu0 0.0
    %428 = vmatpush.msra.mxu0 0.0
    %429 = vmatpush.msra.mxu0 0.0
    %430 = vmatpush.msra.mxu0 %v407
    %431 = vmatpush.msra.mxu0 %v405
    %432 = vmatmul.f32.gmra.mxu0 %v411
    %v433 = vpop.f32.mrf.mxu0
    %v434 = vadd.f32 0.0, %v433
    %435 = vmatmul.f32.gmra.mxu0 %v414
    %v436 = vpop.f32.mrf.mxu0
    %v437 = vadd.f32 0.0, %v436
    %438 = vdwg.mxu0
    %439 = vrot.lane.b32.xlu0 %v95, 104
    %v440 = vpop.permute.xlu0 %439
    %441 = vrot.lane.b32.xlu0 %v96, 104
    %v442 = vpop.permute.xlu0 %441
    %443 = vrot.lane.b32.xlu0 %v95, 72
    %v444 = vpop.permute.xlu0 %443
    %445 = vrot.lane.b32.xlu0 %v96, 72
    %v446 = vpop.permute.xlu0 %445
    %v447 = vsel %vm155, %v440, 0
    %v449 = vsel %vm155, %v442, 0
    %v451 = vsel %vm155, %v444, 0
    %v453 = vsel %vm155, %v446, 0
    %455 = vmatpush.xpose.msra.mxu0 0.0
    %456 = vmatpush.xpose.msra.mxu0 0.0
    %457 = vmatpush.xpose.msra.mxu0 0.0
    %458 = vmatpush.xpose.msra.mxu0 0.0
    %459 = vmatpush.xpose.msra.mxu0 0.0
    %460 = vmatpush.xpose.msra.mxu0 0.0
    %461 = vmatpush.xpose.msra.mxu0 0.0
    %462 = vmatpush.xpose.msra.mxu0 0.0
    %463 = vmatpush.xpose.msra.mxu0 0.0
    %464 = vmatpush.xpose.msra.mxu0 0.0
    %465 = vmatpush.xpose.msra.mxu0 0.0
    %466 = vmatpush.xpose.msra.mxu0 0.0
    %467 = vmatpush.xpose.msra.mxu0 0.0
    %468 = vmatpush.xpose.msra.mxu0 0.0
    %469 = vmatpush.xpose.msra.mxu0 %v453
    %470 = vmatpush.xpose.msra.mxu0 %v451
    %471 = vmatmul.f32.gmra.mxu0 %v447
    %v472 = vpop.f32.mrf.mxu0
    %v473 = vadd.f32 %v147, %v472
    %474 = vmatmul.f32.gmra.mxu0 %v449
    %v475 = vpop.f32.mrf.mxu0
    %v476 = vadd.f32 %v148, %v475
    %477 = vdwg.mxu0
    %v478 = vsel %vm187, %v473, -inf
    %479 = vmax.xlane.f32.xlu0 %v478
    %v480 = vpop.xlane.xlu0 %479
    %v481 = vsel %vm187, %v476, -inf
    %482 = vmax.xlane.f32.xlu0 %v481
    %v483 = vpop.xlane.xlu0 %482
    %v484 = vsub.f32 %v473, %v480
    %v485 = vsub.f32 %v476, %v483
    %v486 = vmul.f32 %v484, 1.442695
    %v487 = vpow.pop %v486
    %v488 = vmul.f32 %v485, 1.442695
    %v489 = vpow.pop %v488
    %v490 = vsel %vm187, %v487, 0.0
    %491 = vadd.xlane.f32.xlu0 %v490
    %v492 = vpop.xlane.xlu0 %491
    %v493 = vsel %vm187, %v489, 0.0
    %494 = vadd.xlane.f32.xlu0 %v493
    %v495 = vpop.xlane.xlu0 %494
    %v496 = vrcp.pop %v492
    %v497 = vrcp.pop %v495
    %v498 = vmul.f32 %v487, %v496
    %v499 = vmul.f32 %v489, %v497
    %500 = vrot.lane.b32.xlu0 %v102, 40
    %v501 = vpop.permute.xlu0 %500
    %502 = vrot.lane.b32.xlu0 %v103, 40
    %v503 = vpop.permute.xlu0 %502
    %v507 = vsel %vm187, %v498, 0
    %v510 = vsel %vm187, %v499, 0
    %512 = vmatpush.msra.mxu0 0.0
    %513 = vmatpush.msra.mxu0 0.0
    %514 = vmatpush.msra.mxu0 0.0
    %515 = vmatpush.msra.mxu0 0.0
    %516 = vmatpush.msra.mxu0 0.0
    %517 = vmatpush.msra.mxu0 0.0
    %518 = vmatpush.msra.mxu0 0.0
    %519 = vmatpush.msra.mxu0 0.0
    %520 = vmatpush.msra.mxu0 0.0
    %521 = vmatpush.msra.mxu0 0.0
    %522 = vmatpush.msra.mxu0 0.0
    %523 = vmatpush.msra.mxu0 0.0
    %524 = vmatpush.msra.mxu0 0.0
    %525 = vmatpush.msra.mxu0 0.0
    %526 = vmatpush.msra.mxu0 %v503
    %527 = vmatpush.msra.mxu0 %v501
    %528 = vmatmul.f32.gmra.mxu0 %v507
    %v529 = vpop.f32.mrf.mxu0
    %v530 = vadd.f32 0.0, %v529
    %531 = vmatmul.f32.gmra.mxu0 %v510
    %v532 = vpop.f32.mrf.mxu0
    %v533 = vadd.f32 0.0, %v532
    %534 = vdwg.mxu0
    %537 = vrot.lane.b32.xlu0 %v338, 8
    %v538 = vpop.permute.xlu0 %537
    %539 = vrot.lane.b32.xlu0 %v341, 8
    %v540 = vpop.permute.xlu0 %539
    %545 = vrot.lane.b32.xlu0 %v434, 16
    %v546 = vpop.permute.xlu0 %545
    %547 = vrot.lane.b32.xlu0 %v437, 16
    %v548 = vpop.permute.xlu0 %547
    %553 = vrot.lane.b32.xlu0 %v530, 24
    %v554 = vpop.permute.xlu0 %553
    %555 = vrot.lane.b32.xlu0 %v533, 24
    %v556 = vpop.permute.xlu0 %555
    %v559 = vsel %vm155, %v242, %v538
    %v560 = vsel %vm155, %v245, %v540
    %v561 = vsel %vm187, %v559, %v546
    %v562 = vsel %vm187, %v560, %v548
    %vm563 = vcmask 195584
    %v564 = vsel %vm563, %v561, %v554
    %v565 = vsel %vm563, %v562, %v556
    %v566 = vperm.slane %v50, 2
    %571 = vrot.lane.b32.xlu0 %v46, 32
    %v572 = vpop.permute.xlu0 %571
    %573 = vrot.lane.b32.xlu0 %v47, 32
    %v574 = vpop.permute.xlu0 %573
    %575 = vrot.lane.b32.xlu0 %v48, 32
    %v576 = vpop.permute.xlu0 %575
    %577 = vrot.lane.b32.xlu0 %v49, 32
    %v578 = vpop.permute.xlu0 %577
    %v584 = vsel %vm52, %v564, 0
    %v587 = vsel %vm52, %v565, 0
    %589 = vmatpush.msra.mxu0 0.0
    %590 = vmatpush.msra.mxu0 0.0
    %591 = vmatpush.msra.mxu0 0.0
    %592 = vmatpush.msra.mxu0 0.0
    %593 = vmatpush.msra.mxu0 0.0
    %594 = vmatpush.msra.mxu0 0.0
    %595 = vmatpush.msra.mxu0 0.0
    %596 = vmatpush.msra.mxu0 0.0
    %597 = vmatpush.msra.mxu0 0.0
    %598 = vmatpush.msra.mxu0 0.0
    %599 = vmatpush.msra.mxu0 0.0
    %600 = vmatpush.msra.mxu0 0.0
    %601 = vmatpush.msra.mxu0 %v578
    %602 = vmatpush.msra.mxu0 %v576
    %603 = vmatpush.msra.mxu0 %v574
    %604 = vmatpush.msra.mxu0 %v572
    %605 = vmatmul.f32.gmra.mxu0 %v584
    %v606 = vpop.f32.mrf.mxu0
    %v607 = vadd.f32 %v566, %v606
    %608 = vmatmul.f32.gmra.mxu0 %v587
    %v609 = vpop.f32.mrf.mxu0
    %v610 = vadd.f32 %v566, %v609
    %611 = vdwg.mxu0
    %v612 = vadd.f32 %v40, %v607
    %v613 = vadd.f32 %v41, %v610
    %v614 = vsel %vm52, %v612, 0.0
    %615 = vadd.xlane.f32.xlu0 %v614
    %v616 = vpop.xlane.xlu0 %615
    %v617 = vsel %vm52, %v613, 0.0
    %618 = vadd.xlane.f32.xlu0 %v617
    %v619 = vpop.xlane.xlu0 %618
    %v620 = vrcp.pop 32.0
    %v621 = vmul.f32 32.0, %v620
    %v622 = vsub.f32 1.0, %v621
    %v623 = vmul.f32 %v620, %v622
    %v624 = vadd.f32 %v620, %v623
    %vm625 = vweird.f32 %v620
    %v626 = vsel %vm625, %v620, %v624
    %v627 = vmul.f32 %v616, %v626
    %v628 = vmul.f32 %v619, %v626
    %v629 = vmul.f32 %v612, %v612
    %v630 = vmul.f32 %v613, %v613
    %v631 = vsel %vm52, %v629, 0.0
    %632 = vadd.xlane.f32.xlu0 %v631
    %v633 = vpop.xlane.xlu0 %632
    %v634 = vsel %vm52, %v630, 0.0
    %635 = vadd.xlane.f32.xlu0 %v634
    %v636 = vpop.xlane.xlu0 %635
    %v637 = vmul.f32 %v633, %v626
    %v638 = vmul.f32 %v636, %v626
    %v639 = vmul.f32 %v627, %v627
    %v640 = vmul.f32 %v628, %v628
    %v641 = vsub.f32 %v637, %v639
    %v642 = vsub.f32 %v638, %v640
    %v643 = vsub.f32 %v612, %v627
    %v644 = vsub.f32 %v613, %v628
    %v645 = vadd.f32 %v641, 1e-05
    %v646 = vadd.f32 %v642, 1e-05
    %v647 = vrsqrt.pop %v645
    %v648 = vmul.f32 %v647, %v645
    %v649 = vmul.f32 %v648, %v647
    %v650 = vmul.f32 0.5, %v649
    %v651 = vsub.f32 1.5, %v650
    %v652 = vmul.f32 %v647, %v651
    %vm653 = vweird.f32 %v645
    %vm654 = vweird.f32 %v647
    %vm655 = vmor %vm653, %vm654
    %v656 = vsel %vm655, %v647, %v652
    %v657 = vrsqrt.pop %v646
    %v658 = vmul.f32 %v657, %v646
    %v659 = vmul.f32 %v658, %v657
    %v660 = vmul.f32 0.5, %v659
    %v661 = vsub.f32 1.5, %v660
    %v662 = vmul.f32 %v657, %v661
    %vm663 = vweird.f32 %v646
    %vm664 = vweird.f32 %v657
    %vm665 = vmor %vm663, %vm664
    %v666 = vsel %vm665, %v657, %v662
    %v667 = vmul.f32 %v643, %v656
    %v668 = vmul.f32 %v644, %v666
    %v669 = vperm.slane %v50, 5
    %v670 = vmul.f32 %v667, %v669
    %v671 = vmul.f32 %v668, %v669
    %v672 = vperm.slane %v50, 6
    %v673 = vadd.f32 %v670, %v672
    %v674 = vadd.f32 %v671, %v672
    %v675 = vld [vmem:[%s3] sm:$0xff]
    %v676 = vld [vmem:[%s3 + $0x8] sm:$0xff]
    %v677 = vld [vmem:[%s3 + $0x10] sm:$0xff]
    %v678 = vld [vmem:[%s3 + $0x18] sm:$0xff]
    %v679 = vperm.slane %v50, 3
    %v681 = vsel %vm52, %v673, 0
    %v684 = vsel %vm52, %v674, 0
    %686 = vmatpush.msra.mxu0 0.0
    %687 = vmatpush.msra.mxu0 0.0
    %688 = vmatpush.msra.mxu0 0.0
    %689 = vmatpush.msra.mxu0 0.0
    %690 = vmatpush.msra.mxu0 0.0
    %691 = vmatpush.msra.mxu0 0.0
    %692 = vmatpush.msra.mxu0 0.0
    %693 = vmatpush.msra.mxu0 0.0
    %694 = vmatpush.msra.mxu0 0.0
    %695 = vmatpush.msra.mxu0 0.0
    %696 = vmatpush.msra.mxu0 0.0
    %697 = vmatpush.msra.mxu0 0.0
    %698 = vmatpush.msra.mxu0 %v678
    %699 = vmatpush.msra.mxu0 %v677
    %700 = vmatpush.msra.mxu0 %v676
    %701 = vmatpush.msra.mxu0 %v675
    %702 = vmatmul.f32.gmra.mxu0 %v681
    %v703 = vpop.f32.mrf.mxu0
    %v704 = vadd.f32 %v679, %v703
    %705 = vmatmul.f32.gmra.mxu0 %v684
    %v706 = vpop.f32.mrf.mxu0
    %v707 = vadd.f32 %v679, %v706
    %708 = vdwg.mxu0
    %v709 = vmax.f32 %v704, 0.0
    %v710 = vmax.f32 %v707, 0.0
    %v711 = vld [vmem:[%s4] sm:$0xff]
    %v712 = vld [vmem:[%s4 + $0x8] sm:$0xff]
    %v713 = vld [vmem:[%s4 + $0x10] sm:$0xff]
    %v714 = vld [vmem:[%s4 + $0x18] sm:$0xff]
    %v715 = vld [vmem:[%s4 + $0x20] sm:$0xff]
    %v716 = vld [vmem:[%s4 + $0x28] sm:$0xff]
    %v717 = vld [vmem:[%s4 + $0x30] sm:$0xff]
    %v718 = vld [vmem:[%s4 + $0x38] sm:$0xff]
    %v719 = vperm.slane %v50, 4
    %vm720 = vcmask 523264
    %v722 = vsel %vm720, %v709, 0
    %v725 = vsel %vm720, %v710, 0
    %727 = vmatpush.msra.mxu0 0.0
    %728 = vmatpush.msra.mxu0 0.0
    %729 = vmatpush.msra.mxu0 0.0
    %730 = vmatpush.msra.mxu0 0.0
    %731 = vmatpush.msra.mxu0 0.0
    %732 = vmatpush.msra.mxu0 0.0
    %733 = vmatpush.msra.mxu0 0.0
    %734 = vmatpush.msra.mxu0 0.0
    %735 = vmatpush.msra.mxu0 %v718
    %736 = vmatpush.msra.mxu0 %v717
    %737 = vmatpush.msra.mxu0 %v716
    %738 = vmatpush.msra.mxu0 %v715
    %739 = vmatpush.msra.mxu0 %v714
    %740 = vmatpush.msra.mxu0 %v713
    %741 = vmatpush.msra.mxu0 %v712
    %742 = vmatpush.msra.mxu0 %v711
    %743 = vmatmul.f32.gmra.mxu0 %v722
    %v744 = vpop.f32.mrf.mxu0
    %v745 = vadd.f32 %v719, %v744
    %746 = vmatmul.f32.gmra.mxu0 %v725
    %v747 = vpop.f32.mrf.mxu0
    %v748 = vadd.f32 %v719, %v747
    %749 = vdwg.mxu0
    %v750 = vadd.f32 %v673, %v745
    %v751 = vadd.f32 %v674, %v748
    %v752 = vsel %vm52, %v750, 0.0
    %753 = vadd.xlane.f32.xlu0 %v752
    %v754 = vpop.xlane.xlu0 %753
    %v755 = vsel %vm52, %v751, 0.0
    %756 = vadd.xlane.f32.xlu0 %v755
    %v757 = vpop.xlane.xlu0 %756
    %v758 = vmul.f32 %v754, %v626
    %v759 = vmul.f32 %v757, %v626
    %v760 = vmul.f32 %v750, %v750
    %v761 = vmul.f32 %v751, %v751
    %v762 = vsel %vm52, %v760, 0.0
    %763 = vadd.xlane.f32.xlu0 %v762
    %v764 = vpop.xlane.xlu0 %763
    %v765 = vsel %vm52, %v761, 0.0
    %766 = vadd.xlane.f32.xlu0 %v765
    %v767 = vpop.xlane.xlu0 %766
    %v768 = vmul.f32 %v764, %v626
    %v769 = vmul.f32 %v767, %v626
    %v770 = vmul.f32 %v758, %v758
    %v771 = vmul.f32 %v759, %v759
    %v772 = vsub.f32 %v768, %v770
    %v773 = vsub.f32 %v769, %v771
    %v774 = vsub.f32 %v750, %v758
    %v775 = vsub.f32 %v751, %v759
    %v776 = vadd.f32 %v772, 1e-05
    %v777 = vadd.f32 %v773, 1e-05
    %v778 = vrsqrt.pop %v776
    %v779 = vmul.f32 %v778, %v776
    %v780 = vmul.f32 %v779, %v778
    %v781 = vmul.f32 0.5, %v780
    %v782 = vsub.f32 1.5, %v781
    %v783 = vmul.f32 %v778, %v782
    %vm784 = vweird.f32 %v776
    %vm785 = vweird.f32 %v778
    %vm786 = vmor %vm784, %vm785
    %v787 = vsel %vm786, %v778, %v783
    %v788 = vrsqrt.pop %v777
    %v789 = vmul.f32 %v788, %v777
    %v790 = vmul.f32 %v789, %v788
    %v791 = vmul.f32 0.5, %v790
    %v792 = vsub.f32 1.5, %v791
    %v793 = vmul.f32 %v788, %v792
    %vm794 = vweird.f32 %v777
    %vm795 = vweird.f32 %v788
    %vm796 = vmor %vm794, %vm795
    %v797 = vsel %vm796, %v788, %v793
    %v798 = vmul.f32 %v774, %v787
    %v799 = vmul.f32 %v775, %v797
    %v800 = vperm.slane %v50, 7
    %v801 = vmul.f32 %v798, %v800
    %v802 = vmul.f32 %v799, %v800
    %v803 = vperm.slane %v51, 0
    %v804 = vadd.f32 %v801, %v803
    %v805 = vadd.f32 %v802, %v803
    %806 = vst.msk [vmem:[#allocation5] sm:$0xff] %vm52, %v804
    %807 = vst.msk [vmem:[#allocation5 + $0x8] sm:$0xff] %vm52, %v805
    // Predicated region
    $region30: #{transformer_encoder_layer.1} parent=1 // pred_check
      _
    $region31: #{transformer_encoder_layer.1} parent=1 // pred_check_branch
      %809 = sbr.rel (0) target = $region33
    $region32: #{transformer_encoder_layer.1} parent=1 // pred_region
      %811 = vsyncadd [#allocation4], 0
      %s812 = sshll.u32 [#allocation5], 4
      %s813 = int_to_ptr.vmem [resolvable:$true] %s812
      %s814 = sshll.u32 %s6, 4
      %s815 = int_to_ptr.hbm [resolvable:$true] %s814
      %820 = dma.vmem_to_hbm [thread:$0]  %s813, 256, %s815, [#allocation4], 128, 128, 8
    $region33: #{transformer_encoder_layer.1} parent=1 // pred_fallthru
      _
    // Predicated region
    $region34: #{transformer_encoder_layer.1} parent=1 // pred_check
      _
    $region35: #{transformer_encoder_layer.1} parent=1 // pred_check_branch
      %822 = sbr.rel (0) target = $region37
    $region36: #{transformer_encoder_layer.1} parent=1 // pred_region
      %824 = dma.done [#allocation4], 256
    $region37: #{transformer_encoder_layer.1} parent=1 // pred_fallthru
      _
    %825 = vsyncpa [#allocation3], 1
    %826 = vsyncpa [#allocation4], 1

</llo_original>
